<compile_context>
chip_gen: v7x
topology: tpu7x:2x2x1
jax: 0.10.0
libtpu: 0.0.40
codegen_flags: <defaults>
</compile_context>

<pallas_src>
import jax
import jax.numpy as jnp
from jax import lax
from jax.experimental import pallas as pl
from jax.experimental.pallas import tpu as pltpu

NINPUTS = 3
NOUTPUTS = 4
HIDDEN = 128

LANE = 128          # TPU lane width
KPAD = 8            # fc1 contraction padded 3 -> 8 so fc1 runs on the MXU
OUTPAD = 8          # output rows padded 4 -> 8: full-sublane unmasked stores
CHUNK_B = 256       # in-kernel batch sub-chunk; hidden chunk = 32 vregs
TILE_B_MAX = 8192   # per-grid-step batch tile (lane axis)
NEG_BIG = -1e9      # bias of padded output rows -> exp()==0 under softmax


def _round_up(n, m):
    return ((n + m - 1) // m) * m


def _choose_tile(batch, tile_b_max):
    """Pick (tile_b, b_pad) so that tile_b | b_pad, tile_b is lane-aligned,
    a multiple of CHUNK_B when large, and the grid has >=2 steps for B > 128
    (lets dimension_semantics=('parallel',) use both v7x TensorCores)."""
    tmax = _round_up(max(int(tile_b_max), LANE), LANE)
    b_round = _round_up(max(batch, 1), LANE)
    half = _round_up((b_round + 1) // 2, LANE)       # aim for >= 2 grid steps
    tile_b = min(tmax, half)
    if tile_b > CHUNK_B:
        tile_b = _round_up(tile_b, CHUNK_B)          # in-kernel chunking evenness
    b_pad = _round_up(b_round, tile_b)
    return tile_b, b_pad


def _policy_forward_kernel(x_ref, w1_ref, b1_ref, w2_ref, b2_ref, out_ref):
    """Fused feature-major forward for one batch tile.

    x_ref  : (KPAD, TILE_B)    f32, batch on the lane axis (rows 3..7 zero)
    w1_ref : (HIDDEN, KPAD)    f32, fc1.weight zero-padded on K
    b1_ref : (HIDDEN, 1)       f32
    w2_ref : (OUTPAD, HIDDEN)  f32, fc2.weight zero-padded on out rows
    b2_ref : (OUTPAD, 1)       f32, padded rows = NEG_BIG (softmax-neutral)
    out_ref: (OUTPAD, TILE_B)  f32 probabilities, softmax over axis 0
    """
    tile_b = x_ref.shape[-1]
    chunk = min(CHUNK_B, tile_b)
    n_chunks = tile_b // chunk

    # Tiny weights: load + cast once per grid step, reused by every chunk.
    w1 = w1_ref[...].astype(jnp.bfloat16)            # (128, 8)
    w2 = w2_ref[...].astype(jnp.bfloat16)            # (8, 128)
    b1 = b1_ref[...]                                 # (128, 1)
    b2 = b2_ref[...]                                 # (8, 1)

    def body(c, carry):
        off = pl.multiple_of(c * chunk, LANE)
        xc = x_ref[:, pl.ds(off, chunk)].astype(jnp.bfloat16)      # (8, chunk)
        # fc1 on the MXU: (128, 8) @ (8, chunk), f32 accumulate.
        h = jnp.dot(w1, xc, preferred_element_type=jnp.float32)
        h = jnp.maximum(h + b1, 0.0).astype(jnp.bfloat16)          # ReLU
        # fc2 on the MXU: (8, 128) @ (128, chunk), f32 accumulate.
        s = jnp.dot(w2, h, preferred_element_type=jnp.float32) + b2
        # F.softmax(scores, dim=1) == softmax over axis 0 here; padded rows
        # carry score ~ -1e9 -> exp == 0, so they do not perturb the sum.
        s = s - jnp.max(s, axis=0, keepdims=True)
        e = jnp.exp(s)
        out_ref[:, pl.ds(off, chunk)] = e / jnp.sum(e, axis=0, keepdims=True)
        return carry

    lax.fori_loop(0, n_chunks, body, 0, unroll=(n_chunks <= 8))


def policy1_forward(x, w1, b1, w2, b2, *, tile_b_max=TILE_B_MAX):
    """x: (B, NINPUTS) f32; weights/biases in PyTorch nn.Linear layout.

    Returns (B, NOUTPUTS) f32 == F.softmax(fc2(relu(fc1(x))), dim=1).
    """
    B = x.shape[0]
    tile_b, b_pad = _choose_tile(B, tile_b_max)

    # Feature-major input, single pad (no zeros+scatter): (KPAD, b_pad).
    # TODO(synk): callers that can stay feature-major end-to-end should pass
    # (features, batch) activations directly and skip this transpose/pad pass.
    xT = jnp.pad(x.astype(jnp.float32).T,
                 ((0, KPAD - NINPUTS), (0, b_pad - B)))
    w1p = jnp.pad(w1.astype(jnp.float32), ((0, 0), (0, KPAD - NINPUTS)))
    b1c = b1.reshape(HIDDEN, 1).astype(jnp.float32)
    w2p = jnp.pad(w2.astype(jnp.float32), ((0, OUTPAD - NOUTPUTS), (0, 0)))
    b2c = jnp.pad(b2.reshape(NOUTPUTS, 1).astype(jnp.float32),
                  ((0, OUTPAD - NOUTPUTS), (0, 0)), constant_values=NEG_BIG)

    const = lambda i: (0, 0)   # weights: one block, VMEM-resident across grid
    out_T = pl.pallas_call(
        _policy_forward_kernel,
        out_shape=jax.ShapeDtypeStruct((OUTPAD, b_pad), jnp.float32),
        grid=(b_pad // tile_b,),
        in_specs=[
            pl.BlockSpec((KPAD, tile_b), lambda i: (0, i)),
            pl.BlockSpec((HIDDEN, KPAD), const),
            pl.BlockSpec((HIDDEN, 1), const),
            pl.BlockSpec((OUTPAD, HIDDEN), const),
            pl.BlockSpec((OUTPAD, 1), const),
        ],
        out_specs=pl.BlockSpec((OUTPAD, tile_b), lambda i: (0, i)),
        compiler_params=pltpu.CompilerParams(
            dimension_semantics=("parallel",)),   # 2-TC sharding on v7x
    )(xT, w1p, b1c, w2p, b2c)

    return out_T[:NOUTPUTS, :B].T


def init_params(key):
    """Deterministic init mimicking PyTorch nn.Linear defaults
    (uniform(-1/sqrt(fan_in), 1/sqrt(fan_in))), native PyTorch layouts."""
    k1, k2, k3, k4 = jax.random.split(key, 4)
    bound1 = 1.0 / (NINPUTS ** 0.5)
    bound2 = 1.0 / (HIDDEN ** 0.5)
    w1 = jax.random.uniform(k1, (HIDDEN, NINPUTS), jnp.float32, -bound1, bound1)
    b1 = jax.random.uniform(k2, (HIDDEN,), jnp.float32, -bound1, bound1)
    w2 = jax.random.uniform(k3, (NOUTPUTS, HIDDEN), jnp.float32, -bound2, bound2)
    b2 = jax.random.uniform(k4, (NOUTPUTS,), jnp.float32, -bound2, bound2)
    return w1, b1, w2, b2


def _ref_forward(x, w1, b1, w2, b2):
    """Pure-JAX f32 reference of Policy1.forward (PyTorch semantics)."""
    h = jnp.maximum(x @ w1.T + b1, 0.0)
    s = h @ w2.T + b2
    return jax.nn.softmax(s, axis=1)


# TODO(synk): select_action()/update() (Categorical sampling, log_prob
# bookkeeping, Adam step) are host-side training logic, not part of forward.

if __name__ == "__main__":
    key = jax.random.PRNGKey(0)
    k_p, k_x1, k_x2, k_x3 = jax.random.split(key, 4)
    w1, b1, w2, b2 = init_params(k_p)

    # batch=2: spec-consistent small case (grid=(1,), single chunk)
    # batch=300: padded, 2-step grid (tile=256)
    # batch=1536: 2-step grid with 3 in-kernel chunks per tile (tile=768)
    for batch, kx in ((2, k_x1), (300, k_x2), (1536, k_x3)):
        x = jax.random.normal(kx, (batch, NINPUTS), dtype=jnp.float32)
        probs = jax.block_until_ready(policy1_forward(x, w1, b1, w2, b2))
        expect = _ref_forward(x, w1, b1, w2, b2)

        assert probs.shape == (batch, NOUTPUTS)
        # Exact divide in the kernel -> rows normalize to f32 precision.
        assert bool(jnp.all(jnp.abs(jnp.sum(probs, axis=1) - 1.0) < 1e-5))
        # bf16 MXU operands (f32 accumulate): widened tolerance vs f32 ref.
        assert bool(jnp.max(jnp.abs(probs - expect)) < 2e-2)

    print("KERNEL_OK")
</pallas_src>

<mosaic_0001>
module attributes {stable_mosaic.version = 11 : i64} {
  func.func @_policy_forward_kernel(%arg0: i32, %arg1: memref<8x128xf32, #tpu.memory_space<vmem>>, %arg2: memref<128x8xf32, #tpu.memory_space<vmem>>, %arg3: memref<128x1xf32, #tpu.memory_space<vmem>>, %arg4: memref<8x128xf32, #tpu.memory_space<vmem>>, %arg5: memref<8x1xf32, #tpu.memory_space<vmem>>, %arg6: memref<8x128xf32, #tpu.memory_space<vmem>>) attributes {dimension_semantics = [#tpu.dimension_semantics<parallel>], iteration_bounds = array<i64: 1>, scalar_prefetch = 0 : i64, scratch_operands = 0 : i64, tpu.core_type = #tpu.core_type<tc>, window_params = [{transform_indices = @transform_0, window_bounds = array<i64: 8, 128>}, {pipeline_mode = #tpu.pipeline_mode<synchronous>, transform_indices = @transform_1, window_bounds = array<i64: 128, 8>}, {pipeline_mode = #tpu.pipeline_mode<synchronous>, transform_indices = @transform_2, window_bounds = array<i64: 128, 1>}, {pipeline_mode = #tpu.pipeline_mode<synchronous>, transform_indices = @transform_3, window_bounds = array<i64: 8, 128>}, {pipeline_mode = #tpu.pipeline_mode<synchronous>, transform_indices = @transform_4, window_bounds = array<i64: 8, 1>}, {transform_indices = @transform_5, window_bounds = array<i64: 8, 128>}]} {
    %c0 = arith.constant 0 : index
    %c0_0 = arith.constant 0 : index
    %0 = vector.load %arg2[%c0, %c0_0] : memref<128x8xf32, #tpu.memory_space<vmem>>, vector<128x8xf32>
    %1 = arith.truncf %0 : vector<128x8xf32> to vector<128x8xbf16>
    %c0_1 = arith.constant 0 : index
    %c0_2 = arith.constant 0 : index
    %2 = vector.load %arg4[%c0_1, %c0_2] : memref<8x128xf32, #tpu.memory_space<vmem>>, vector<8x128xf32>
    %3 = arith.truncf %2 : vector<8x128xf32> to vector<8x128xbf16>
    %c0_3 = arith.constant 0 : index
    %c0_4 = arith.constant 0 : index
    %4 = vector.load %arg3[%c0_3, %c0_4] : memref<128x1xf32, #tpu.memory_space<vmem>>, vector<128x1xf32>
    %c0_5 = arith.constant 0 : index
    %c0_6 = arith.constant 0 : index
    %5 = vector.load %arg5[%c0_5, %c0_6] : memref<8x1xf32, #tpu.memory_space<vmem>>, vector<8x1xf32>
    %c0_i32 = arith.constant 0 : i32
    %c128_i32 = arith.constant 128 : i32
    %6 = arith.muli %c0_i32, %c128_i32 : i32
    %7 = tpu.assume_multiple %6, 128 : i32
    %c0_7 = arith.constant 0 : index
    %8 = arith.index_cast %7 : i32 to index
    %9 = vector.load %arg1[%c0_7, %8] : memref<8x128xf32, #tpu.memory_space<vmem>>, vector<8x128xf32>
    %10 = arith.truncf %9 : vector<8x128xf32> to vector<8x128xbf16>
    %cst = arith.constant dense<0.000000e+00> : vector<128x128xf32>
    %11 = tpu.matmul %1, %10, %cst {dimension_numbers = #tpu.dot_dimension_numbers<[1], [0], [0], [1], [0, 0, 1, 1], [], []>} : vector<128x8xbf16>, vector<8x128xbf16>, vector<128x128xf32> -> vector<128x128xf32>
    %12 = vector.broadcast %4 : vector<128x1xf32> to vector<128x128xf32>
    %13 = arith.addf %11, %12 : vector<128x128xf32>
    %cst_8 = arith.constant 0.000000e+00 : f32
    %14 = vector.broadcast %cst_8 : f32 to vector<128x128xf32>
    %15 = arith.maximumf %13, %14 : vector<128x128xf32>
    %16 = arith.truncf %15 : vector<128x128xf32> to vector<128x128xbf16>
    %cst_9 = arith.constant dense<0.000000e+00> : vector<8x128xf32>
    %17 = tpu.matmul %3, %16, %cst_9 {dimension_numbers = #tpu.dot_dimension_numbers<[1], [0], [0], [1], [0, 0, 1, 1], [], []>} : vector<8x128xbf16>, vector<128x128xbf16>, vector<8x128xf32> -> vector<8x128xf32>
    %18 = vector.broadcast %5 : vector<8x1xf32> to vector<8x128xf32>
    %19 = arith.addf %17, %18 : vector<8x128xf32>
    %cst_10 = arith.constant dense<0xFF800000> : vector<128xf32>
    %20 = vector.multi_reduction <maximumf>, %19, %cst_10 [0] : vector<8x128xf32> to vector<128xf32>
    %21 = vector.shape_cast %20 : vector<128xf32> to vector<1x128xf32>
    %22 = vector.broadcast %21 : vector<1x128xf32> to vector<8x128xf32>
    %23 = arith.subf %19, %22 : vector<8x128xf32>
    %24 = math.exp %23 : vector<8x128xf32>
    %cst_11 = arith.constant dense<0.000000e+00> : vector<128xf32>
    %25 = vector.multi_reduction <add>, %24, %cst_11 [0] : vector<8x128xf32> to vector<128xf32>
    %26 = vector.shape_cast %25 : vector<128xf32> to vector<1x128xf32>
    %27 = vector.broadcast %26 : vector<1x128xf32> to vector<8x128xf32>
    %28 = arith.divf %24, %27 : vector<8x128xf32>
    %c0_12 = arith.constant 0 : index
    %29 = arith.index_cast %7 : i32 to index
    %30 = vector.load %arg6[%c0_12, %29] : memref<8x128xf32, #tpu.memory_space<vmem>>, vector<8x128xf32>
    tpu.vector_store %arg6[%c0_12, %29], %28 {strides = array<i32>} : memref<8x128xf32, #tpu.memory_space<vmem>>, vector<8x128xf32>,
    %c1_i32 = arith.constant 1 : i32
    return
  }
  func.func @transform_0(%arg0: i32) -> (i32, i32) {
    %c0_i32 = arith.constant 0 : i32
    %c0_i32_0 = arith.constant 0 : i32
    return %c0_i32, %arg0 : i32, i32
  }
  func.func @transform_1(%arg0: i32) -> (i32, i32) {
    %c0_i32 = arith.constant 0 : i32
    %c0_i32_0 = arith.constant 0 : i32
    %c0_i32_1 = arith.constant 0 : i32
    return %c0_i32, %c0_i32_0 : i32, i32
  }
  func.func @transform_2(%arg0: i32) -> (i32, i32) {
    %c0_i32 = arith.constant 0 : i32
    %c0_i32_0 = arith.constant 0 : i32
    %c0_i32_1 = arith.constant 0 : i32
    return %c0_i32, %c0_i32_0 : i32, i32
  }
  func.func @transform_3(%arg0: i32) -> (i32, i32) {
    %c0_i32 = arith.constant 0 : i32
    %c0_i32_0 = arith.constant 0 : i32
    %c0_i32_1 = arith.constant 0 : i32
    return %c0_i32, %c0_i32_0 : i32, i32
  }
  func.func @transform_4(%arg0: i32) -> (i32, i32) {
    %c0_i32 = arith.constant 0 : i32
    %c0_i32_0 = arith.constant 0 : i32
    %c0_i32_1 = arith.constant 0 : i32
    return %c0_i32, %c0_i32_0 : i32, i32
  }
  func.func @transform_5(%arg0: i32) -> (i32, i32) {
    %c0_i32 = arith.constant 0 : i32
    %c0_i32_0 = arith.constant 0 : i32
    return %c0_i32, %arg0 : i32, i32
  }
}

</mosaic_0001>

<llo_original>
// kernel: tpu_custom_call.1
$region0: #{tpu_custom_call.1}
  #allocation0 [shape = 'u32[]', space=smem, size = 0x4, offset = 0x4, fixed_abs, tag = 'smem constant byte address 0x4 - core index']
  #allocation1 [shape = 'u32[144,128]{1,0:T(1,128)}', space=vmem, size = 0x12000, scoped, tag = 'internal scratch']
  %s0 = inlined_call_operand.vmem [shape: f32[8,128], index: 0, kind: input, shape index: {}]
  %s1 = inlined_call_operand.vmem [shape: f32[128,8], index: 1, kind: input, shape index: {}]
  %s2 = inlined_call_operand.vmem [shape: f32[128,1], index: 2, kind: input, shape index: {}]
  %s3 = inlined_call_operand.vmem [shape: f32[8,128], index: 3, kind: input, shape index: {}]
  %s4 = inlined_call_operand.vmem [shape: f32[8,1], index: 4, kind: input, shape index: {}]
  %s5 = inlined_call_operand.hbm [shape: f32[8,128], index: 5, kind: output, shape index: {}]
  %s6 = sld [smem:[#allocation0]]
  $region30: #{tpu_custom_call.1} parent=0
    _
  %s8 = ssub.s32 1, %s6
  %s9 = scalar_select 0, %s8, %s6
  $region1: #{tpu_custom_call.1} parent=0
    #allocation2 [shape = 'u8[4096]{0}', space=vmem, size = 0x1000, scoped, tag = 'output window, operand 0, single buffered']
    #allocation3 [shape = 's32[1]{0}', space=sflag, size = 0x4, scoped, tag = 'scoped memory for tpu_custom_call.1']
    %10 = vsyncpa [#allocation3], 0
    // Predicated region
    $region2: #{tpu_custom_call.1} parent=1 // pred_check
      _
    $region3: #{tpu_custom_call.1} parent=1 // pred_check_branch
      %12 = sbr.rel (0) target = $region5
    $region4: #{tpu_custom_call.1} parent=1 // pred_region
      _
    $region5: #{tpu_custom_call.1} parent=1 // pred_fallthru
      _
    // Predicated region
    $region6: #{tpu_custom_call.1} parent=1 // pred_check
      _
    $region7: #{tpu_custom_call.1} parent=1 // pred_check_branch
      %14 = sbr.rel (0) target = $region9
    $region8: #{tpu_custom_call.1} parent=1 // pred_region
      _
    $region9: #{tpu_custom_call.1} parent=1 // pred_fallthru
      _
    // Predicated region
    $region10: #{tpu_custom_call.1} parent=1 // pred_check
      _
    $region11: #{tpu_custom_call.1} parent=1 // pred_check_branch
      %16 = sbr.rel (0) target = $region13
    $region12: #{tpu_custom_call.1} parent=1 // pred_region
      _
    $region13: #{tpu_custom_call.1} parent=1 // pred_fallthru
      _
    // Predicated region
    $region14: #{tpu_custom_call.1} parent=1 // pred_check
      _
    $region15: #{tpu_custom_call.1} parent=1 // pred_check_branch
      %18 = sbr.rel (0) target = $region17
    $region16: #{tpu_custom_call.1} parent=1 // pred_region
      _
    $region17: #{tpu_custom_call.1} parent=1 // pred_fallthru
      _
    // Predicated region
    $region18: #{tpu_custom_call.1} parent=1 // pred_check
      _
    $region19: #{tpu_custom_call.1} parent=1 // pred_check_branch
      %20 = sbr.rel (0) target = $region21
    $region20: #{tpu_custom_call.1} parent=1 // pred_region
      _
    $region21: #{tpu_custom_call.1} parent=1 // pred_fallthru
      _
    %v22 = vld [vmem:[%s1] sm:$0xff]
    %v23 = vld [vmem:[%s1 + $0x8] sm:$0xff]
    %v24 = vld [vmem:[%s1 + $0x10] sm:$0xff]
    %v25 = vld [vmem:[%s1 + $0x18] sm:$0xff]
    %v26 = vld [vmem:[%s1 + $0x20] sm:$0xff]
    %v27 = vld [vmem:[%s1 + $0x28] sm:$0xff]
    %v28 = vld [vmem:[%s1 + $0x30] sm:$0xff]
    %v29 = vld [vmem:[%s1 + $0x38] sm:$0xff]
    %v30 = vld [vmem:[%s1 + $0x40] sm:$0xff]
    %v31 = vld [vmem:[%s1 + $0x48] sm:$0xff]
    %v32 = vld [vmem:[%s1 + $0x50] sm:$0xff]
    %v33 = vld [vmem:[%s1 + $0x58] sm:$0xff]
    %v34 = vld [vmem:[%s1 + $0x60] sm:$0xff]
    %v35 = vld [vmem:[%s1 + $0x68] sm:$0xff]
    %v36 = vld [vmem:[%s1 + $0x70] sm:$0xff]
    %v37 = vld [vmem:[%s1 + $0x78] sm:$0xff]
    %v38 = vpack.c.bf16 %v23, %v22
    %v39 = vpack.c.bf16 %v25, %v24
    %v40 = vpack.c.bf16 %v27, %v26
    %v41 = vpack.c.bf16 %v29, %v28
    %v42 = vpack.c.bf16 %v31, %v30
    %v43 = vpack.c.bf16 %v33, %v32
    %v44 = vpack.c.bf16 %v35, %v34
    %v45 = vpack.c.bf16 %v37, %v36
    %v46 = vld [vmem:[%s3] sm:$0xff]
    %v47 = vpack.c.bf16 %v46, %v46
    %v48 = vld [vmem:[%s2] sm:$0xff]
    %v49 = vld [vmem:[%s2 + $0x8] sm:$0xff]
    %v50 = vld [vmem:[%s2 + $0x10] sm:$0xff]
    %v51 = vld [vmem:[%s2 + $0x18] sm:$0xff]
    %v52 = vld [vmem:[%s2 + $0x20] sm:$0xff]
    %v53 = vld [vmem:[%s2 + $0x28] sm:$0xff]
    %v54 = vld [vmem:[%s2 + $0x30] sm:$0xff]
    %v55 = vld [vmem:[%s2 + $0x38] sm:$0xff]
    %v56 = vld [vmem:[%s2 + $0x40] sm:$0xff]
    %v57 = vld [vmem:[%s2 + $0x48] sm:$0xff]
    %v58 = vld [vmem:[%s2 + $0x50] sm:$0xff]
    %v59 = vld [vmem:[%s2 + $0x58] sm:$0xff]
    %v60 = vld [vmem:[%s2 + $0x60] sm:$0xff]
    %v61 = vld [vmem:[%s2 + $0x68] sm:$0xff]
    %v62 = vld [vmem:[%s2 + $0x70] sm:$0xff]
    %v63 = vld [vmem:[%s2 + $0x78] sm:$0xff]
    %v64 = vld [vmem:[%s4] sm:$0xff]
    %v65 = vld [vmem:[%s0] sm:$0xff]
    %v66 = vpack.c.bf16 %v65, %v65
    %68 = vset.pattern.permute.xlu0 0
    %69 = vperm.xlu0 %68, %v48
    %v70 = vpop.permute.xlu0 %69
    %73 = vset.pattern.permute.xlu0 0
    %74 = vperm.xlu0 %73, %v49
    %v75 = vpop.permute.xlu0 %74
    %78 = vset.pattern.permute.xlu0 0
    %79 = vperm.xlu0 %78, %v50
    %v80 = vpop.permute.xlu0 %79
    %83 = vset.pattern.permute.xlu0 0
    %84 = vperm.xlu0 %83, %v51
    %v85 = vpop.permute.xlu0 %84
    %88 = vset.pattern.permute.xlu0 0
    %89 = vperm.xlu0 %88, %v52
    %v90 = vpop.permute.xlu0 %89
    %93 = vset.pattern.permute.xlu0 0
    %94 = vperm.xlu0 %93, %v53
    %v95 = vpop.permute.xlu0 %94
    %98 = vset.pattern.permute.xlu0 0
    %99 = vperm.xlu0 %98, %v54
    %v100 = vpop.permute.xlu0 %99
    %103 = vset.pattern.permute.xlu0 0
    %104 = vperm.xlu0 %103, %v55
    %v105 = vpop.permute.xlu0 %104
    %108 = vset.pattern.permute.xlu0 0
    %109 = vperm.xlu0 %108, %v56
    %v110 = vpop.permute.xlu0 %109
    %113 = vset.pattern.permute.xlu0 0
    %114 = vperm.xlu0 %113, %v57
    %v115 = vpop.permute.xlu0 %114
    %118 = vset.pattern.permute.xlu0 0
    %119 = vperm.xlu0 %118, %v58
    %v120 = vpop.permute.xlu0 %119
    %123 = vset.pattern.permute.xlu0 0
    %124 = vperm.xlu0 %123, %v59
    %v125 = vpop.permute.xlu0 %124
    %128 = vset.pattern.permute.xlu0 0
    %129 = vperm.xlu0 %128, %v60
    %v130 = vpop.permute.xlu0 %129
    %133 = vset.pattern.permute.xlu0 0
    %134 = vperm.xlu0 %133, %v61
    %v135 = vpop.permute.xlu0 %134
    %138 = vset.pattern.permute.xlu0 0
    %139 = vperm.xlu0 %138, %v62
    %v140 = vpop.permute.xlu0 %139
    %143 = vset.pattern.permute.xlu0 0
    %144 = vperm.xlu0 %143, %v63
    %v145 = vpop.permute.xlu0 %144
    %vm147 = vcmask 64512
    %v149 = vsel %vm147, %v38, 0
    %v152 = vsel %vm147, %v39, 0
    %v155 = vsel %vm147, %v40, 0
    %v158 = vsel %vm147, %v41, 0
    %v161 = vsel %vm147, %v42, 0
    %v164 = vsel %vm147, %v43, 0
    %v167 = vsel %vm147, %v44, 0
    %v170 = vsel %vm147, %v45, 0
    %vm172 = vcmask 1043456
    %v174 = vsel %vm172, %v66, 0
    %176 = vmatprep.subr.bf16.mxu0 0
    %177 = vmatpush1.bf16.msra.mxu0 %v174
    %178 = vmatprep.subr.bf16.mxu0 0
    %179 = vmatpush1.bf16.msra.mxu0 0
    %180 = vmatprep.subr.bf16.mxu0 0
    %181 = vmatpush1.bf16.msra.mxu0 0
    %182 = vmatprep.subr.bf16.mxu0 0
    %183 = vmatpush1.bf16.msra.mxu0 0
    %184 = vmatprep.subr.bf16.mxu0 0
    %185 = vmatpush1.bf16.msra.mxu0 0
    %186 = vmatprep.subr.bf16.mxu0 0
    %187 = vmatpush1.bf16.msra.mxu0 0
    %188 = vmatprep.subr.bf16.mxu0 0
    %189 = vmatpush1.bf16.msra.mxu0 0
    %190 = vmatprep.subr.bf16.mxu0 0
    %191 = vmatpush1.bf16.msra.mxu0 0
    %192 = vmatprep.subr.bf16.mxu0 0
    %193 = vmatpush1.bf16.msra.mxu0 0
    %194 = vmatprep.subr.bf16.mxu0 0
    %195 = vmatpush1.bf16.msra.mxu0 0
    %196 = vmatprep.subr.bf16.mxu0 0
    %197 = vmatpush1.bf16.msra.mxu0 0
    %198 = vmatprep.subr.bf16.mxu0 0
    %199 = vmatpush1.bf16.msra.mxu0 0
    %200 = vmatprep.subr.bf16.mxu0 0
    %201 = vmatpush1.bf16.msra.mxu0 0
    %202 = vmatprep.subr.bf16.mxu0 0
    %203 = vmatpush1.bf16.msra.mxu0 0
    %204 = vmatprep.subr.bf16.mxu0 0
    %205 = vmatpush1.bf16.msra.mxu0 0
    %206 = vmatprep.subr.bf16.mxu0 0
    %207 = vmatpush1.bf16.msra.mxu0 0
    %208 = vmatprep.mubr.bf16.mxu0 0
    %209 = vmatmul.mubr.bf16.gmra.mrb[0].mxu0 %v149
    %v210 = vpop.f32.mrb[0].mxu0
    %v211 = vadd.f32 %v70, %v210
    %v212 = vpop.f32.mrb[0].mxu0
    %v213 = vpop.f32.mrb[0].mxu0
    %v214 = vadd.f32 %v75, %v213
    %v215 = vpop.f32.mrb[0].mxu0
    %216 = vmatprep.mubr.bf16.mxu0 0
    %217 = vmatmul.mubr.bf16.gmra.mrb[0].mxu0 %v152
    %v218 = vpop.f32.mrb[0].mxu0
    %v219 = vadd.f32 %v80, %v218
    %v220 = vpop.f32.mrb[0].mxu0
    %v221 = vpop.f32.mrb[0].mxu0
    %v222 = vadd.f32 %v85, %v221
    %v223 = vpop.f32.mrb[0].mxu0
    %224 = vmatprep.mubr.bf16.mxu0 0
    %225 = vmatmul.mubr.bf16.gmra.mrb[0].mxu0 %v155
    %v226 = vpop.f32.mrb[0].mxu0
    %v227 = vadd.f32 %v90, %v226
    %v228 = vpop.f32.mrb[0].mxu0
    %v229 = vpop.f32.mrb[0].mxu0
    %v230 = vadd.f32 %v95, %v229
    %v231 = vpop.f32.mrb[0].mxu0
    %232 = vmatprep.mubr.bf16.mxu0 0
    %233 = vmatmul.mubr.bf16.gmra.mrb[0].mxu0 %v158
    %v234 = vpop.f32.mrb[0].mxu0
    %v235 = vadd.f32 %v100, %v234
    %v236 = vpop.f32.mrb[0].mxu0
    %v237 = vpop.f32.mrb[0].mxu0
    %v238 = vadd.f32 %v105, %v237
    %v239 = vpop.f32.mrb[0].mxu0
    %240 = vmatprep.mubr.bf16.mxu0 0
    %241 = vmatmul.mubr.bf16.gmra.mrb[0].mxu0 %v161
    %v242 = vpop.f32.mrb[0].mxu0
    %v243 = vadd.f32 %v110, %v242
    %v244 = vpop.f32.mrb[0].mxu0
    %v245 = vpop.f32.mrb[0].mxu0
    %v246 = vadd.f32 %v115, %v245
    %v247 = vpop.f32.mrb[0].mxu0
    %248 = vmatprep.mubr.bf16.mxu0 0
    %249 = vmatmul.mubr.bf16.gmra.mrb[0].mxu0 %v164
    %v250 = vpop.f32.mrb[0].mxu0
    %v251 = vadd.f32 %v120, %v250
    %v252 = vpop.f32.mrb[0].mxu0
    %v253 = vpop.f32.mrb[0].mxu0
    %v254 = vadd.f32 %v125, %v253
    %v255 = vpop.f32.mrb[0].mxu0
    %256 = vmatprep.mubr.bf16.mxu0 0
    %257 = vmatmul.mubr.bf16.gmra.mrb[0].mxu0 %v167
    %v258 = vpop.f32.mrb[0].mxu0
    %v259 = vadd.f32 %v130, %v258
    %v260 = vpop.f32.mrb[0].mxu0
    %v261 = vpop.f32.mrb[0].mxu0
    %v262 = vadd.f32 %v135, %v261
    %v263 = vpop.f32.mrb[0].mxu0
    %264 = vmatprep.mubr.bf16.mxu0 0
    %265 = vmatmul.mubr.bf16.gmra.mrb[0].mxu0 %v170
    %v266 = vpop.f32.mrb[0].mxu0
    %v267 = vadd.f32 %v140, %v266
    %v268 = vpop.f32.mrb[0].mxu0
    %v269 = vpop.f32.mrb[0].mxu0
    %v270 = vadd.f32 %v145, %v269
    %v271 = vpop.f32.mrb[0].mxu0
    %272 = vdwg.mxu0
    %v273 = vmax.f32 %v211, 0.0
    %v274 = vmax.f32 %v214, 0.0
    %v275 = vmax.f32 %v219, 0.0
    %v276 = vmax.f32 %v222, 0.0
    %v277 = vmax.f32 %v227, 0.0
    %v278 = vmax.f32 %v230, 0.0
    %v279 = vmax.f32 %v235, 0.0
    %v280 = vmax.f32 %v238, 0.0
    %v281 = vmax.f32 %v243, 0.0
    %v282 = vmax.f32 %v246, 0.0
    %v283 = vmax.f32 %v251, 0.0
    %v284 = vmax.f32 %v254, 0.0
    %v285 = vmax.f32 %v259, 0.0
    %v286 = vmax.f32 %v262, 0.0
    %v287 = vmax.f32 %v267, 0.0
    %v288 = vmax.f32 %v270, 0.0
    %v289 = vpack.c.bf16 %v274, %v273
    %v290 = vpack.c.bf16 %v276, %v275
    %v291 = vpack.c.bf16 %v278, %v277
    %v292 = vpack.c.bf16 %v280, %v279
    %v293 = vpack.c.bf16 %v282, %v281
    %v294 = vpack.c.bf16 %v284, %v283
    %v295 = vpack.c.bf16 %v286, %v285
    %v296 = vpack.c.bf16 %v288, %v287
    %298 = vset.pattern.permute.xlu0 0
    %299 = vperm.xlu0 %298, %v64
    %v300 = vpop.permute.xlu0 %299
    %302 = vmatprep.subr.bf16.mxu0 0
    %303 = vmatpush1.bf16.msra.mxu0 %v289
    %304 = vmatprep.subr.bf16.mxu0 0
    %305 = vmatpush1.bf16.msra.mxu0 %v290
    %306 = vmatprep.subr.bf16.mxu0 0
    %307 = vmatpush1.bf16.msra.mxu0 %v291
    %308 = vmatprep.subr.bf16.mxu0 0
    %309 = vmatpush1.bf16.msra.mxu0 %v292
    %310 = vmatprep.subr.bf16.mxu0 0
    %311 = vmatpush1.bf16.msra.mxu0 %v293
    %312 = vmatprep.subr.bf16.mxu0 0
    %313 = vmatpush1.bf16.msra.mxu0 %v294
    %314 = vmatprep.subr.bf16.mxu0 0
    %315 = vmatpush1.bf16.msra.mxu0 %v295
    %316 = vmatprep.subr.bf16.mxu0 0
    %317 = vmatpush1.bf16.msra.mxu0 %v296
    %318 = vmatprep.subr.bf16.mxu0 0
    %319 = vmatpush1.bf16.msra.mxu0 0
    %320 = vmatprep.subr.bf16.mxu0 0
    %321 = vmatpush1.bf16.msra.mxu0 0
    %322 = vmatprep.subr.bf16.mxu0 0
    %323 = vmatpush1.bf16.msra.mxu0 0
    %324 = vmatprep.subr.bf16.mxu0 0
    %325 = vmatpush1.bf16.msra.mxu0 0
    %326 = vmatprep.subr.bf16.mxu0 0
    %327 = vmatpush1.bf16.msra.mxu0 0
    %328 = vmatprep.subr.bf16.mxu0 0
    %329 = vmatpush1.bf16.msra.mxu0 0
    %330 = vmatprep.subr.bf16.mxu0 0
    %331 = vmatpush1.bf16.msra.mxu0 0
    %332 = vmatprep.subr.bf16.mxu0 0
    %333 = vmatpush1.bf16.msra.mxu0 0
    %334 = vmatprep.mubr.bf16.mxu0 0
    %335 = vmatmul.mubr.bf16.gmra.mrb[0].mxu0 %v47
    %v336 = vpop.f32.mrb[0].mxu0
    %v337 = vadd.f32 %v300, %v336
    %v338 = vpop.f32.mrb[0].mxu0
    %v339 = vpop.f32.mrb[0].mxu0
    %v340 = vpop.f32.mrb[0].mxu0
    %341 = vdwg.mxu0
    %v342 = vrot.slane %v337, 4
    %v343 = vmax.f32 %v337, %v342
    %v344 = vrot.slane %v343, 2
    %v345 = vmax.f32 %v343, %v344
    %v346 = vrot.slane %v345, 1
    %v347 = vmax.f32 %v345, %v346
    %v348 = vsub.f32 %v337, %v347
    %v349 = vmul.f32 %v348, 1.442695
    %v350 = vpow.pop %v349
    %v351 = vrot.slane %v350, 4
    %v352 = vadd.f32 %v350, %v351
    %v353 = vrot.slane %v352, 2
    %v354 = vadd.f32 %v352, %v353
    %v355 = vrot.slane %v354, 1
    %v356 = vadd.f32 %v354, %v355
    %v357 = vrcp.pop %v356
    %v358 = vmul.f32 %v350, %v357
    %359 = vst [vmem:[#allocation2] sm:$0xff] %v358
    // Predicated region
    $region22: #{tpu_custom_call.1} parent=1 // pred_check
      _
    $region23: #{tpu_custom_call.1} parent=1 // pred_check_branch
      %361 = sbr.rel (0) target = $region25
    $region24: #{tpu_custom_call.1} parent=1 // pred_region
      %s363 = ssub.s32 128, 128
      %364 = vsyncadd [#allocation3], %s363
      %s366 = sshll.u32 [#allocation2], 4
      %s367 = int_to_ptr.vmem [resolvable:$true] %s366
      %369 = dma.vmem_to_hbm [thread:$0]  %s367, 128, %s5, [#allocation3]
    $region25: #{tpu_custom_call.1} parent=1 // pred_fallthru
      _
    // Predicated region
    $region26: #{tpu_custom_call.1} parent=1 // pred_check
      _
    $region27: #{tpu_custom_call.1} parent=1 // pred_check_branch
      %371 = sbr.rel (0) target = $region29
    $region28: #{tpu_custom_call.1} parent=1 // pred_region
      %372 = dma.done [#allocation3], 128
    $region29: #{tpu_custom_call.1} parent=1 // pred_fallthru
      _
    %373 = vsyncpa [#allocation3], 1

</llo_original>
